<compile_context>
chip_gen: v7x
topology: tpu7x:2x2x1
jax: 0.10.0
libtpu: 0.0.40
codegen_flags: <defaults>
</compile_context>

<pallas_src>
import functools

import jax
import jax.numpy as jnp
from jax.experimental import pallas as pl
from jax.experimental.pallas import tpu as pltpu


def _conv2d_im2col_kernel(x_ref, w_ref, b_ref, o_ref, patches_ref, *,
                          N, C_in, C_out, H, W, KH, KW, CPAD):
    # x_ref:       (N, C_in, H*W)        NCHW images, spatial flattened onto lanes
    # w_ref:       (C_out, KH*KW*CPAD)   weights, k-order = (kh, kw, ci) zero-padded to CPAD
    # b_ref:       (C_out, 1)
    # o_ref:       (N, C_out, H*W)       "full-frame" conv; wrapper slices valid window
    # patches_ref: (KH*KW*CPAD, N*H*W)   VMEM scratch: sublane-aligned im2col slab
    HW = H * W
    NHW = N * HW

    # One lane-dense slab holding all images side by side: (C_in, N*HW).
    # Lane offsets of the pieces are multiples of HW=256 -> 128-aligned, no masked merge.
    xcat = jnp.concatenate([x_ref[n] for n in range(N)], axis=1)

    # Zero the padded im2col slab once.  The pad rows meet zero weight columns, but they
    # must be deterministic zeros (stale VMEM could hold NaNs and 0*NaN = NaN).
    patches_ref[...] = jnp.zeros_like(patches_ref)

    # im2col via static lane rolls (XLU slot): taps[t][:, l] == xcat[:, (l + kh*W + kw) % NHW].
    # For valid output lanes l = n*HW + i*W + j (i < H_out, j < W_out) the shifted index
    # stays inside image n, so those lanes are exact; wrap/cross-image garbage only lands
    # in the discarded border.  Each tap goes to an 8-sublane-aligned row block.
    for kh in range(KH):
        for kw in range(KW):
            s = kh * W + kw
            t = kh * KW + kw
            tap = xcat if s == 0 else pltpu.roll(xcat, shift=NHW - s, axis=1)
            patches_ref[t * CPAD: t * CPAD + C_in, :] = tap

    # One MXU dot for the entire batch: (C_out, K) x (K, N*HW), f32 accumulate.
    acc = jnp.dot(w_ref[...], patches_ref[...],
                  preferred_element_type=jnp.float32)
    acc = acc + b_ref[...]                       # single bias broadcast for the batch

    # Lane-aligned per-image stores (slice offsets are multiples of HW=256).
    for n in range(N):
        o_ref[n] = acc[:, n * HW:(n + 1) * HW].astype(o_ref.dtype)


@jax.jit
def conv2d_pallas(x_nchw, w_oihw, bias):
    """Valid (padding=0), stride=1 conv. x: (N, Cin, H, W), w: (Cout, Cin, KH, KW)."""
    N, C_in, H, W = x_nchw.shape
    C_out, _, KH, KW = w_oihw.shape
    H_out, W_out = H - KH + 1, W - KW + 1
    HW = H * W
    CPAD = 8                                     # sublane-aligned rows per filter tap

    # Free reshape of the contiguous NCHW input; tiny one-time weight flatten + zero-pad.
    x3d = x_nchw.reshape(N, C_in, HW)
    w_k = jnp.transpose(w_oihw, (0, 2, 3, 1))                      # (Cout, KH, KW, Cin)
    w_k = jnp.pad(w_k, ((0, 0), (0, 0), (0, 0), (0, CPAD - C_in)))  # pad Cin -> CPAD
    w2d = w_k.reshape(C_out, KH * KW * CPAD)
    b2d = bias.reshape(C_out, 1)

    kernel = functools.partial(_conv2d_im2col_kernel, N=N, C_in=C_in, C_out=C_out,
                               H=H, W=W, KH=KH, KW=KW, CPAD=CPAD)

    out3d = pl.pallas_call(
        kernel,
        out_shape=jax.ShapeDtypeStruct((N, C_out, HW), x_nchw.dtype),
        in_specs=[pl.BlockSpec(memory_space=pltpu.MemorySpace.VMEM)] * 3,
        out_specs=pl.BlockSpec(memory_space=pltpu.MemorySpace.VMEM),
        scratch_shapes=[pltpu.VMEM((KH * KW * CPAD, N * HW), jnp.float32)],
    )(x3d, w2d, b2d)

    # NCHW output: free reshape + slice dropping the invalid right/bottom borders.
    # TODO(synk): Midori.forward ends here; if a downstream op existed (ReLU/pool/next
    # layer), fuse it into the kernel instead of paying this slice's extra HBM round trip.
    return out3d.reshape(N, C_out, H, W)[:, :, :H_out, :W_out]


if __name__ == "__main__":
    key = jax.random.PRNGKey(0)
    kx, kw, kb = jax.random.split(key, 3)

    # Midori: Conv2d(3 -> 6, kernel=3, stride=1, padding=0)
    N, C_in, H, W = 2, 3, 16, 16
    C_out, KH, KW = 6, 3, 3

    x = jax.random.normal(kx, (N, C_in, H, W), jnp.float32)
    # Deterministic synthetic init (fan-in-scaled uniform, same flavor as torch default).
    bound = 1.0 / (C_in * KH * KW) ** 0.5
    w = jax.random.uniform(kw, (C_out, C_in, KH, KW), jnp.float32, -bound, bound)
    b = jax.random.uniform(kb, (C_out,), jnp.float32, -bound, bound)

    out = conv2d_pallas(x, w, b)
    jax.block_until_ready(out)

    # Sanity check against XLA's conv (NCHW, OIHW, valid padding).  Tolerance leaves a
    # little headroom for the MXU f32 matmul path.
    ref = jax.lax.conv_general_dilated(
        x, w, window_strides=(1, 1), padding="VALID",
        dimension_numbers=("NCHW", "OIHW", "NCHW")) + b.reshape(1, C_out, 1, 1)
    assert out.shape == (N, C_out, H - KH + 1, W - KW + 1)
    assert jnp.allclose(out, ref, atol=2e-4, rtol=2e-4)

    print("KERNEL_OK")
</pallas_src>

<mosaic_0001>
module attributes {stable_mosaic.version = 11 : i64} {
  func.func @_conv2d_im2col_kernel(%arg0: memref<2x3x256xf32, #tpu.memory_space<vmem>>, %arg1: memref<6x72xf32, #tpu.memory_space<vmem>>, %arg2: memref<6x1xf32, #tpu.memory_space<vmem>>, %arg3: memref<2x6x256xf32, #tpu.memory_space<vmem>>, %arg4: memref<72x512xf32, #tpu.memory_space<vmem>>) attributes {dimension_semantics = [], scalar_prefetch = 0 : i64, scratch_operands = 1 : i64, tpu.core_type = #tpu.core_type<tc>} {
    %c0 = arith.constant 0 : index
    %c0_0 = arith.constant 0 : index
    %c0_1 = arith.constant 0 : index
    %0 = vector.load %arg0[%c0, %c0_0, %c0_1] : memref<2x3x256xf32, #tpu.memory_space<vmem>>, vector<1x3x256xf32>
    %1 = vector.shape_cast %0 : vector<1x3x256xf32> to vector<3x256xf32>
    %c1 = arith.constant 1 : index
    %c0_2 = arith.constant 0 : index
    %c0_3 = arith.constant 0 : index
    %2 = vector.load %arg0[%c1, %c0_2, %c0_3] : memref<2x3x256xf32, #tpu.memory_space<vmem>>, vector<1x3x256xf32>
    %3 = vector.shape_cast %2 : vector<1x3x256xf32> to vector<3x256xf32>
    %4 = tpu.concatenate %1, %3 in 1 : vector<3x256xf32>, vector<3x256xf32> -> vector<3x512xf32>
    %cst = arith.constant 0.000000e+00 : f32
    %5 = vector.broadcast %cst : f32 to vector<72x512xf32>
    %c0_4 = arith.constant 0 : index
    %c0_5 = arith.constant 0 : index
    %6 = vector.load %arg4[%c0_4, %c0_5] : memref<72x512xf32, #tpu.memory_space<vmem>>, vector<72x512xf32>
    tpu.vector_store %arg4[%c0_4, %c0_5], %5 {strides = array<i32>} : memref<72x512xf32, #tpu.memory_space<vmem>>, vector<72x512xf32>,
    %c0_6 = arith.constant 0 : index
    %c0_7 = arith.constant 0 : index
    %7 = vector.load %arg4[%c0_6, %c0_7] : memref<72x512xf32, #tpu.memory_space<vmem>>, vector<3x512xf32>
    tpu.vector_store %arg4[%c0_6, %c0_7], %4 {strides = array<i32>} : memref<72x512xf32, #tpu.memory_space<vmem>>, vector<3x512xf32>,
    %c511_i32 = arith.constant 511 : i32
    %8 = tpu.dynamic_rotate %4 by %c511_i32 dim 1 : vector<3x512xf32>, i32 -> vector<3x512xf32>
    %c8 = arith.constant 8 : index
    %c0_8 = arith.constant 0 : index
    %9 = vector.load %arg4[%c8, %c0_8] : memref<72x512xf32, #tpu.memory_space<vmem>>, vector<3x512xf32>
    tpu.vector_store %arg4[%c8, %c0_8], %8 {strides = array<i32>} : memref<72x512xf32, #tpu.memory_space<vmem>>, vector<3x512xf32>,
    %c510_i32 = arith.constant 510 : i32
    %10 = tpu.dynamic_rotate %4 by %c510_i32 dim 1 : vector<3x512xf32>, i32 -> vector<3x512xf32>
    %c16 = arith.constant 16 : index
    %c0_9 = arith.constant 0 : index
    %11 = vector.load %arg4[%c16, %c0_9] : memref<72x512xf32, #tpu.memory_space<vmem>>, vector<3x512xf32>
    tpu.vector_store %arg4[%c16, %c0_9], %10 {strides = array<i32>} : memref<72x512xf32, #tpu.memory_space<vmem>>, vector<3x512xf32>,
    %c496_i32 = arith.constant 496 : i32
    %12 = tpu.dynamic_rotate %4 by %c496_i32 dim 1 : vector<3x512xf32>, i32 -> vector<3x512xf32>
    %c24 = arith.constant 24 : index
    %c0_10 = arith.constant 0 : index
    %13 = vector.load %arg4[%c24, %c0_10] : memref<72x512xf32, #tpu.memory_space<vmem>>, vector<3x512xf32>
    tpu.vector_store %arg4[%c24, %c0_10], %12 {strides = array<i32>} : memref<72x512xf32, #tpu.memory_space<vmem>>, vector<3x512xf32>,
    %c495_i32 = arith.constant 495 : i32
    %14 = tpu.dynamic_rotate %4 by %c495_i32 dim 1 : vector<3x512xf32>, i32 -> vector<3x512xf32>
    %c32 = arith.constant 32 : index
    %c0_11 = arith.constant 0 : index
    %15 = vector.load %arg4[%c32, %c0_11] : memref<72x512xf32, #tpu.memory_space<vmem>>, vector<3x512xf32>
    tpu.vector_store %arg4[%c32, %c0_11], %14 {strides = array<i32>} : memref<72x512xf32, #tpu.memory_space<vmem>>, vector<3x512xf32>,
    %c494_i32 = arith.constant 494 : i32
    %16 = tpu.dynamic_rotate %4 by %c494_i32 dim 1 : vector<3x512xf32>, i32 -> vector<3x512xf32>
    %c40 = arith.constant 40 : index
    %c0_12 = arith.constant 0 : index
    %17 = vector.load %arg4[%c40, %c0_12] : memref<72x512xf32, #tpu.memory_space<vmem>>, vector<3x512xf32>
    tpu.vector_store %arg4[%c40, %c0_12], %16 {strides = array<i32>} : memref<72x512xf32, #tpu.memory_space<vmem>>, vector<3x512xf32>,
    %c480_i32 = arith.constant 480 : i32
    %18 = tpu.dynamic_rotate %4 by %c480_i32 dim 1 : vector<3x512xf32>, i32 -> vector<3x512xf32>
    %c48 = arith.constant 48 : index
    %c0_13 = arith.constant 0 : index
    %19 = vector.load %arg4[%c48, %c0_13] : memref<72x512xf32, #tpu.memory_space<vmem>>, vector<3x512xf32>
    tpu.vector_store %arg4[%c48, %c0_13], %18 {strides = array<i32>} : memref<72x512xf32, #tpu.memory_space<vmem>>, vector<3x512xf32>,
    %c479_i32 = arith.constant 479 : i32
    %20 = tpu.dynamic_rotate %4 by %c479_i32 dim 1 : vector<3x512xf32>, i32 -> vector<3x512xf32>
    %c56 = arith.constant 56 : index
    %c0_14 = arith.constant 0 : index
    %21 = vector.load %arg4[%c56, %c0_14] : memref<72x512xf32, #tpu.memory_space<vmem>>, vector<3x512xf32>
    tpu.vector_store %arg4[%c56, %c0_14], %20 {strides = array<i32>} : memref<72x512xf32, #tpu.memory_space<vmem>>, vector<3x512xf32>,
    %c478_i32 = arith.constant 478 : i32
    %22 = tpu.dynamic_rotate %4 by %c478_i32 dim 1 : vector<3x512xf32>, i32 -> vector<3x512xf32>
    %c64 = arith.constant 64 : index
    %c0_15 = arith.constant 0 : index
    %23 = vector.load %arg4[%c64, %c0_15] : memref<72x512xf32, #tpu.memory_space<vmem>>, vector<3x512xf32>
    tpu.vector_store %arg4[%c64, %c0_15], %22 {strides = array<i32>} : memref<72x512xf32, #tpu.memory_space<vmem>>, vector<3x512xf32>,
    %c0_16 = arith.constant 0 : index
    %c0_17 = arith.constant 0 : index
    %24 = vector.load %arg1[%c0_16, %c0_17] : memref<6x72xf32, #tpu.memory_space<vmem>>, vector<6x72xf32>
    %c0_18 = arith.constant 0 : index
    %c0_19 = arith.constant 0 : index
    %25 = vector.load %arg4[%c0_18, %c0_19] : memref<72x512xf32, #tpu.memory_space<vmem>>, vector<72x512xf32>
    %cst_20 = arith.constant dense<0.000000e+00> : vector<6x512xf32>
    %26 = tpu.matmul %24, %25, %cst_20 {dimension_numbers = #tpu.dot_dimension_numbers<[1], [0], [0], [1], [0, 0, 1, 1], [], []>} : vector<6x72xf32>, vector<72x512xf32>, vector<6x512xf32> -> vector<6x512xf32>
    %c0_21 = arith.constant 0 : index
    %c0_22 = arith.constant 0 : index
    %27 = vector.load %arg2[%c0_21, %c0_22] : memref<6x1xf32, #tpu.memory_space<vmem>>, vector<6x1xf32>
    %28 = vector.broadcast %27 : vector<6x1xf32> to vector<6x512xf32>
    %29 = arith.addf %26, %28 : vector<6x512xf32>
    %30 = vector.extract_strided_slice %29 {offsets = [0, 0], sizes = [6, 256], strides = [1, 1]} : vector<6x512xf32> to vector<6x256xf32>
    %c0_23 = arith.constant 0 : index
    %c0_24 = arith.constant 0 : index
    %c0_25 = arith.constant 0 : index
    %31 = vector.load %arg3[%c0_23, %c0_24, %c0_25] : memref<2x6x256xf32, #tpu.memory_space<vmem>>, vector<1x6x256xf32>
    %32 = vector.shape_cast %31 : vector<1x6x256xf32> to vector<6x256xf32>
    %33 = vector.shape_cast %30 : vector<6x256xf32> to vector<1x6x256xf32>
    tpu.vector_store %arg3[%c0_23, %c0_24, %c0_25], %33 {strides = array<i32>} : memref<2x6x256xf32, #tpu.memory_space<vmem>>, vector<1x6x256xf32>,
    %34 = vector.extract_strided_slice %29 {offsets = [0, 256], sizes = [6, 256], strides = [1, 1]} : vector<6x512xf32> to vector<6x256xf32>
    %c1_26 = arith.constant 1 : index
    %c0_27 = arith.constant 0 : index
    %c0_28 = arith.constant 0 : index
    %35 = vector.load %arg3[%c1_26, %c0_27, %c0_28] : memref<2x6x256xf32, #tpu.memory_space<vmem>>, vector<1x6x256xf32>
    %36 = vector.shape_cast %35 : vector<1x6x256xf32> to vector<6x256xf32>
    %37 = vector.shape_cast %34 : vector<6x256xf32> to vector<1x6x256xf32>
    tpu.vector_store %arg3[%c1_26, %c0_27, %c0_28], %37 {strides = array<i32>} : memref<2x6x256xf32, #tpu.memory_space<vmem>>, vector<1x6x256xf32>,
    return
  }
}

</mosaic_0001>

<llo_original>
// kernel: conv2d_pallas.1
$region0: #{conv2d_pallas.1}
  #allocation0 [shape = 'u32[]', space=smem, size = 0x4, offset = 0x4, fixed_abs, tag = 'smem constant byte address 0x4 - core index']
  #allocation1 [shape = 'u32[144,128]{1,0:T(1,128)}', space=vmem, size = 0x12000, scoped, tag = 'internal scratch']
  #allocation2 [shape = 'f32[72,512]{1,0:T(8,128)}', space=vmem, size = 0x24000, scoped, tag = 'scratch operand']
  %s0 = inlined_call_operand.vmem [shape: f32[2,3,256], index: 0, kind: input, shape index: {}]
  %s1 = inlined_call_operand.vmem [shape: f32[6,72], index: 1, kind: input, shape index: {}]
  %s2 = inlined_call_operand.vmem [shape: f32[6,1], index: 2, kind: input, shape index: {}]
  %s3 = inlined_call_operand.vmem [shape: f32[2,6,256], index: 3, kind: output, shape index: {}]
  %s4 = sld [smem:[#allocation0]]
  $region22: #{conv2d_pallas.1} parent=0
    _
  %s6 = ssub.s32 1, %s4
  %s7 = scalar_select 0, %s6, %s4
  // Predicated region
  $region2: #{conv2d_pallas.1} parent=0 // pred_check
    _
  $region3: #{conv2d_pallas.1} parent=0 // pred_check_branch
    %9 = sbr.rel (0) target = $region5
  $region4: #{conv2d_pallas.1} parent=0 // pred_region
    _
  $region5: #{conv2d_pallas.1} parent=0 // pred_fallthru
    _
  // Predicated region
  $region6: #{conv2d_pallas.1} parent=0 // pred_check
    _
  $region7: #{conv2d_pallas.1} parent=0 // pred_check_branch
    %11 = sbr.rel (0) target = $region9
  $region8: #{conv2d_pallas.1} parent=0 // pred_region
    _
  $region9: #{conv2d_pallas.1} parent=0 // pred_fallthru
    _
  // Predicated region
  $region10: #{conv2d_pallas.1} parent=0 // pred_check
    _
  $region11: #{conv2d_pallas.1} parent=0 // pred_check_branch
    %13 = sbr.rel (0) target = $region13
  $region12: #{conv2d_pallas.1} parent=0 // pred_region
    _
  $region13: #{conv2d_pallas.1} parent=0 // pred_fallthru
    _
  %v14 = vld [vmem:[%s0] sm:$0x77]
  %s15 = scalar_lea.vmem %s0, 8
  %v16 = vld [vmem:[%s15] sm:$0x77]
  %v18 = vcombine.high %v14, %v14
  %v21 = vcombine.high %v16, %v16
  %23 = vst [vmem:[#allocation2] sm:$0xff] 0.0
  %24 = vst [vmem:[#allocation2 + $0x8] sm:$0xff] 0.0
  %25 = vst [vmem:[#allocation2 + $0x10] sm:$0xff] 0.0
  %26 = vst [vmem:[#allocation2 + $0x18] sm:$0xff] 0.0
  %27 = vst [vmem:[#allocation2 + $0x20] sm:$0xff] 0.0
  %28 = vst [vmem:[#allocation2 + $0x28] sm:$0xff] 0.0
  %29 = vst [vmem:[#allocation2 + $0x30] sm:$0xff] 0.0
  %30 = vst [vmem:[#allocation2 + $0x38] sm:$0xff] 0.0
  %31 = vst [vmem:[#allocation2 + $0x40] sm:$0xff] 0.0
  %32 = vst [vmem:[#allocation2 + $0x48] sm:$0xff] 0.0
  %33 = vst [vmem:[#allocation2 + $0x50] sm:$0xff] 0.0
  %34 = vst [vmem:[#allocation2 + $0x58] sm:$0xff] 0.0
  %35 = vst [vmem:[#allocation2 + $0x60] sm:$0xff] 0.0
  %36 = vst [vmem:[#allocation2 + $0x68] sm:$0xff] 0.0
  %37 = vst [vmem:[#allocation2 + $0x70] sm:$0xff] 0.0
  %38 = vst [vmem:[#allocation2 + $0x78] sm:$0xff] 0.0
  %39 = vst [vmem:[#allocation2 + $0x80] sm:$0xff] 0.0
  %40 = vst [vmem:[#allocation2 + $0x88] sm:$0xff] 0.0
  %41 = vst [vmem:[#allocation2 + $0x90] sm:$0xff] 0.0
  %42 = vst [vmem:[#allocation2 + $0x98] sm:$0xff] 0.0
  %43 = vst [vmem:[#allocation2 + $0xa0] sm:$0xff] 0.0
  %44 = vst [vmem:[#allocation2 + $0xa8] sm:$0xff] 0.0
  %45 = vst [vmem:[#allocation2 + $0xb0] sm:$0xff] 0.0
  %46 = vst [vmem:[#allocation2 + $0xb8] sm:$0xff] 0.0
  %47 = vst [vmem:[#allocation2 + $0xc0] sm:$0xff] 0.0
  %48 = vst [vmem:[#allocation2 + $0xc8] sm:$0xff] 0.0
  %49 = vst [vmem:[#allocation2 + $0xd0] sm:$0xff] 0.0
  %50 = vst [vmem:[#allocation2 + $0xd8] sm:$0xff] 0.0
  %51 = vst [vmem:[#allocation2 + $0xe0] sm:$0xff] 0.0
  %52 = vst [vmem:[#allocation2 + $0xe8] sm:$0xff] 0.0
  %53 = vst [vmem:[#allocation2 + $0xf0] sm:$0xff] 0.0
  %54 = vst [vmem:[#allocation2 + $0xf8] sm:$0xff] 0.0
  %55 = vst [vmem:[#allocation2 + $0x100] sm:$0xff] 0.0
  %56 = vst [vmem:[#allocation2 + $0x108] sm:$0xff] 0.0
  %57 = vst [vmem:[#allocation2 + $0x110] sm:$0xff] 0.0
  %58 = vst [vmem:[#allocation2 + $0x118] sm:$0xff] 0.0
  %59 = vst [vmem:[#allocation2] sm:$0x7] %v14
  %60 = vst [vmem:[#allocation2 + $0x8] sm:$0x7] %v18
  %61 = vst [vmem:[#allocation2 + $0x10] sm:$0x7] %v16
  %62 = vst [vmem:[#allocation2 + $0x18] sm:$0x7] %v21
  %63 = vrot.lane.b32.xlu0 %v14, 127
  %v64 = vpop.permute.xlu0 %63
  %65 = vrot.lane.b32.xlu0 %v18, 127
  %v66 = vpop.permute.xlu0 %65
  %67 = vrot.lane.b32.xlu0 %v16, 127
  %v68 = vpop.permute.xlu0 %67
  %69 = vrot.lane.b32.xlu0 %v21, 127
  %v70 = vpop.permute.xlu0 %69
  %v71 = vlaneseq
  %v72 = vand.u32 %v71, 127
  %vm73 = vcmp.lt.s32.totalorder %v72, 127
  %v74 = vsel %vm73, %v68, %v70
  %v75 = vsel %vm73, %v66, %v68
  %v76 = vsel %vm73, %v64, %v66
  %v77 = vsel %vm73, %v70, %v64
  %78 = vst [vmem:[#allocation2 + $0x20] sm:$0x7] %v76
  %79 = vst [vmem:[#allocation2 + $0x28] sm:$0x7] %v75
  %80 = vst [vmem:[#allocation2 + $0x30] sm:$0x7] %v74
  %81 = vst [vmem:[#allocation2 + $0x38] sm:$0x7] %v77
  %82 = vrot.lane.b32.xlu0 %v14, 126
  %v83 = vpop.permute.xlu0 %82
  %84 = vrot.lane.b32.xlu0 %v18, 126
  %v85 = vpop.permute.xlu0 %84
  %86 = vrot.lane.b32.xlu0 %v16, 126
  %v87 = vpop.permute.xlu0 %86
  %88 = vrot.lane.b32.xlu0 %v21, 126
  %v89 = vpop.permute.xlu0 %88
  %vm90 = vcmp.lt.s32.totalorder %v72, 126
  %v91 = vsel %vm90, %v87, %v89
  %v92 = vsel %vm90, %v85, %v87
  %v93 = vsel %vm90, %v83, %v85
  %v94 = vsel %vm90, %v89, %v83
  %95 = vst [vmem:[#allocation2 + $0x40] sm:$0x7] %v93
  %96 = vst [vmem:[#allocation2 + $0x48] sm:$0x7] %v92
  %97 = vst [vmem:[#allocation2 + $0x50] sm:$0x7] %v91
  %98 = vst [vmem:[#allocation2 + $0x58] sm:$0x7] %v94
  %99 = vrot.lane.b32.xlu0 %v14, 112
  %v100 = vpop.permute.xlu0 %99
  %101 = vrot.lane.b32.xlu0 %v18, 112
  %v102 = vpop.permute.xlu0 %101
  %103 = vrot.lane.b32.xlu0 %v16, 112
  %v104 = vpop.permute.xlu0 %103
  %105 = vrot.lane.b32.xlu0 %v21, 112
  %v106 = vpop.permute.xlu0 %105
  %vm107 = vcmp.lt.s32.totalorder %v72, 112
  %v108 = vsel %vm107, %v104, %v106
  %v109 = vsel %vm107, %v102, %v104
  %v110 = vsel %vm107, %v100, %v102
  %v111 = vsel %vm107, %v106, %v100
  %112 = vst [vmem:[#allocation2 + $0x60] sm:$0x7] %v110
  %113 = vst [vmem:[#allocation2 + $0x68] sm:$0x7] %v109
  %114 = vst [vmem:[#allocation2 + $0x70] sm:$0x7] %v108
  %115 = vst [vmem:[#allocation2 + $0x78] sm:$0x7] %v111
  %116 = vrot.lane.b32.xlu0 %v14, 111
  %v117 = vpop.permute.xlu0 %116
  %118 = vrot.lane.b32.xlu0 %v18, 111
  %v119 = vpop.permute.xlu0 %118
  %120 = vrot.lane.b32.xlu0 %v16, 111
  %v121 = vpop.permute.xlu0 %120
  %122 = vrot.lane.b32.xlu0 %v21, 111
  %v123 = vpop.permute.xlu0 %122
  %vm124 = vcmp.lt.s32.totalorder %v72, 111
  %v125 = vsel %vm124, %v121, %v123
  %v126 = vsel %vm124, %v119, %v121
  %v127 = vsel %vm124, %v117, %v119
  %v128 = vsel %vm124, %v123, %v117
  %129 = vst [vmem:[#allocation2 + $0x80] sm:$0x7] %v127
  %130 = vst [vmem:[#allocation2 + $0x88] sm:$0x7] %v126
  %131 = vst [vmem:[#allocation2 + $0x90] sm:$0x7] %v125
  %132 = vst [vmem:[#allocation2 + $0x98] sm:$0x7] %v128
  %133 = vrot.lane.b32.xlu0 %v14, 110
  %v134 = vpop.permute.xlu0 %133
  %135 = vrot.lane.b32.xlu0 %v18, 110
  %v136 = vpop.permute.xlu0 %135
  %137 = vrot.lane.b32.xlu0 %v16, 110
  %v138 = vpop.permute.xlu0 %137
  %139 = vrot.lane.b32.xlu0 %v21, 110
  %v140 = vpop.permute.xlu0 %139
  %vm141 = vcmp.lt.s32.totalorder %v72, 110
  %v142 = vsel %vm141, %v138, %v140
  %v143 = vsel %vm141, %v136, %v138
  %v144 = vsel %vm141, %v134, %v136
  %v145 = vsel %vm141, %v140, %v134
  %146 = vst [vmem:[#allocation2 + $0xa0] sm:$0x7] %v144
  %147 = vst [vmem:[#allocation2 + $0xa8] sm:$0x7] %v143
  %148 = vst [vmem:[#allocation2 + $0xb0] sm:$0x7] %v142
  %149 = vst [vmem:[#allocation2 + $0xb8] sm:$0x7] %v145
  %150 = vrot.lane.b32.xlu0 %v14, 96
  %v151 = vpop.permute.xlu0 %150
  %152 = vrot.lane.b32.xlu0 %v18, 96
  %v153 = vpop.permute.xlu0 %152
  %154 = vrot.lane.b32.xlu0 %v16, 96
  %v155 = vpop.permute.xlu0 %154
  %156 = vrot.lane.b32.xlu0 %v21, 96
  %v157 = vpop.permute.xlu0 %156
  %vm158 = vcmp.lt.s32.totalorder %v72, 96
  %v159 = vsel %vm158, %v155, %v157
  %v160 = vsel %vm158, %v153, %v155
  %v161 = vsel %vm158, %v151, %v153
  %v162 = vsel %vm158, %v157, %v151
  %163 = vst [vmem:[#allocation2 + $0xc0] sm:$0x7] %v161
  %164 = vst [vmem:[#allocation2 + $0xc8] sm:$0x7] %v160
  %165 = vst [vmem:[#allocation2 + $0xd0] sm:$0x7] %v159
  %166 = vst [vmem:[#allocation2 + $0xd8] sm:$0x7] %v162
  %167 = vrot.lane.b32.xlu0 %v14, 95
  %v168 = vpop.permute.xlu0 %167
  %169 = vrot.lane.b32.xlu0 %v18, 95
  %v170 = vpop.permute.xlu0 %169
  %171 = vrot.lane.b32.xlu0 %v16, 95
  %v172 = vpop.permute.xlu0 %171
  %173 = vrot.lane.b32.xlu0 %v21, 95
  %v174 = vpop.permute.xlu0 %173
  %vm175 = vcmp.lt.s32.totalorder %v72, 95
  %v176 = vsel %vm175, %v172, %v174
  %v177 = vsel %vm175, %v170, %v172
  %v178 = vsel %vm175, %v168, %v170
  %v179 = vsel %vm175, %v174, %v168
  %180 = vst [vmem:[#allocation2 + $0xe0] sm:$0x7] %v178
  %181 = vst [vmem:[#allocation2 + $0xe8] sm:$0x7] %v177
  %182 = vst [vmem:[#allocation2 + $0xf0] sm:$0x7] %v176
  %183 = vst [vmem:[#allocation2 + $0xf8] sm:$0x7] %v179
  %184 = vrot.lane.b32.xlu0 %v14, 94
  %v185 = vpop.permute.xlu0 %184
  %186 = vrot.lane.b32.xlu0 %v18, 94
  %v187 = vpop.permute.xlu0 %186
  %188 = vrot.lane.b32.xlu0 %v16, 94
  %v189 = vpop.permute.xlu0 %188
  %190 = vrot.lane.b32.xlu0 %v21, 94
  %v191 = vpop.permute.xlu0 %190
  %vm192 = vcmp.lt.s32.totalorder %v72, 94
  %v193 = vsel %vm192, %v189, %v191
  %v194 = vsel %vm192, %v187, %v189
  %v195 = vsel %vm192, %v185, %v187
  %v196 = vsel %vm192, %v191, %v185
  %197 = vst [vmem:[#allocation2 + $0x100] sm:$0x7] %v195
  %198 = vst [vmem:[#allocation2 + $0x108] sm:$0x7] %v194
  %199 = vst [vmem:[#allocation2 + $0x110] sm:$0x7] %v193
  %200 = vst [vmem:[#allocation2 + $0x118] sm:$0x7] %v196
  %v201 = vld [vmem:[%s1] sm:$0x3f]
  %v202 = vld [vmem:[#allocation2] sm:$0xff]
  %v203 = vld [vmem:[#allocation2 + $0x8] sm:$0xff]
  %v204 = vld [vmem:[#allocation2 + $0x10] sm:$0xff]
  %v205 = vld [vmem:[#allocation2 + $0x18] sm:$0xff]
  %v206 = vld [vmem:[#allocation2 + $0x20] sm:$0xff]
  %v207 = vld [vmem:[#allocation2 + $0x28] sm:$0xff]
  %v208 = vld [vmem:[#allocation2 + $0x30] sm:$0xff]
  %v209 = vld [vmem:[#allocation2 + $0x38] sm:$0xff]
  %v210 = vld [vmem:[#allocation2 + $0x40] sm:$0xff]
  %v211 = vld [vmem:[#allocation2 + $0x48] sm:$0xff]
  %v212 = vld [vmem:[#allocation2 + $0x50] sm:$0xff]
  %v213 = vld [vmem:[#allocation2 + $0x58] sm:$0xff]
  %v214 = vld [vmem:[#allocation2 + $0x60] sm:$0xff]
  %v215 = vld [vmem:[#allocation2 + $0x68] sm:$0xff]
  %v216 = vld [vmem:[#allocation2 + $0x70] sm:$0xff]
  %v217 = vld [vmem:[#allocation2 + $0x78] sm:$0xff]
  %v218 = vld [vmem:[#allocation2 + $0x80] sm:$0xff]
  %v219 = vld [vmem:[#allocation2 + $0x88] sm:$0xff]
  %v220 = vld [vmem:[#allocation2 + $0x90] sm:$0xff]
  %v221 = vld [vmem:[#allocation2 + $0x98] sm:$0xff]
  %v222 = vld [vmem:[#allocation2 + $0xa0] sm:$0xff]
  %v223 = vld [vmem:[#allocation2 + $0xa8] sm:$0xff]
  %v224 = vld [vmem:[#allocation2 + $0xb0] sm:$0xff]
  %v225 = vld [vmem:[#allocation2 + $0xb8] sm:$0xff]
  %v226 = vld [vmem:[#allocation2 + $0xc0] sm:$0xff]
  %v227 = vld [vmem:[#allocation2 + $0xc8] sm:$0xff]
  %v228 = vld [vmem:[#allocation2 + $0xd0] sm:$0xff]
  %v229 = vld [vmem:[#allocation2 + $0xd8] sm:$0xff]
  %v230 = vld [vmem:[#allocation2 + $0xe0] sm:$0xff]
  %v231 = vld [vmem:[#allocation2 + $0xe8] sm:$0xff]
  %v232 = vld [vmem:[#allocation2 + $0xf0] sm:$0xff]
  %v233 = vld [vmem:[#allocation2 + $0xf8] sm:$0xff]
  %v234 = vld [vmem:[#allocation2 + $0x100] sm:$0xff]
  %v235 = vld [vmem:[#allocation2 + $0x108] sm:$0xff]
  %v236 = vld [vmem:[#allocation2 + $0x110] sm:$0xff]
  %v237 = vld [vmem:[#allocation2 + $0x118] sm:$0xff]
  %v238 = vld [vmem:[%s2] sm:$0x3f]
  %240 = vset.pattern.permute.xlu0 0
  %241 = vperm.xlu0 %240, %v238
  %v242 = vpop.permute.xlu0 %241
  %vm244 = vcmask 588800
  %v246 = vsel %vm244, %v201, 0
  %248 = vmatprep.subr.mxu0 %v203
  %249 = vmatpush1.msra.mxu0 %v202
  %250 = vmatprep.subr.mxu0 %v207
  %251 = vmatpush1.msra.mxu0 %v206
  %252 = vmatprep.subr.mxu0 %v211
  %253 = vmatpush1.msra.mxu0 %v210
  %254 = vmatprep.subr.mxu0 %v215
  %255 = vmatpush1.msra.mxu0 %v214
  %256 = vmatprep.subr.mxu0 %v219
  %257 = vmatpush1.msra.mxu0 %v218
  %258 = vmatprep.subr.mxu0 %v223
  %259 = vmatpush1.msra.mxu0 %v222
  %260 = vmatprep.subr.mxu0 %v227
  %261 = vmatpush1.msra.mxu0 %v226
  %262 = vmatprep.subr.mxu0 %v231
  %263 = vmatpush1.msra.mxu0 %v230
  %264 = vmatprep.subr.mxu0 %v235
  %265 = vmatpush1.msra.mxu0 %v234
  %266 = vmatprep.subr.mxu0 0.0
  %267 = vmatpush1.msra.mxu0 0.0
  %268 = vmatprep.subr.mxu0 0.0
  %269 = vmatpush1.msra.mxu0 0.0
  %270 = vmatprep.subr.mxu0 0.0
  %271 = vmatpush1.msra.mxu0 0.0
  %272 = vmatprep.subr.mxu0 0.0
  %273 = vmatpush1.msra.mxu0 0.0
  %274 = vmatprep.subr.mxu0 0.0
  %275 = vmatpush1.msra.mxu0 0.0
  %276 = vmatprep.subr.mxu0 0.0
  %277 = vmatpush1.msra.mxu0 0.0
  %278 = vmatprep.subr.mxu0 0.0
  %279 = vmatpush1.msra.mxu0 0.0
  %280 = vmatprep.subr.mxu0 0.0
  %281 = vmatpush1.msra.mxu0 0.0
  %282 = vmatprep.subr.mxu0 0.0
  %283 = vmatpush1.msra.mxu0 0.0
  %284 = vmatprep.subr.mxu0 0.0
  %285 = vmatpush1.msra.mxu0 0.0
  %286 = vmatprep.subr.mxu0 0.0
  %287 = vmatpush1.msra.mxu0 0.0
  %288 = vmatprep.subr.mxu0 0.0
  %289 = vmatpush1.msra.mxu0 0.0
  %290 = vmatprep.subr.mxu0 0.0
  %291 = vmatpush1.msra.mxu0 0.0
  %292 = vmatprep.subr.mxu0 0.0
  %293 = vmatpush1.msra.mxu0 0.0
  %294 = vmatprep.subr.mxu0 0.0
  %295 = vmatpush1.msra.mxu0 0.0
  %296 = vmatprep.subr.mxu0 0.0
  %297 = vmatpush1.msra.mxu0 0.0
  %298 = vmatprep.subr.mxu0 0.0
  %299 = vmatpush1.msra.mxu0 0.0
  %300 = vmatprep.subr.mxu0 0.0
  %301 = vmatpush1.msra.mxu0 0.0
  %302 = vmatprep.subr.mxu0 0.0
  %303 = vmatpush1.msra.mxu0 0.0
  %304 = vmatprep.subr.mxu0 0.0
  %305 = vmatpush1.msra.mxu0 0.0
  %306 = vmatprep.subr.mxu0 0.0
  %307 = vmatpush1.msra.mxu0 0.0
  %308 = vmatprep.subr.mxu0 0.0
  %309 = vmatpush1.msra.mxu0 0.0
  %310 = vmatprep.subr.mxu0 0.0
  %311 = vmatpush1.msra.mxu0 0.0
  %312 = vmatprep.mubr.f32.mxu0 0.0
  %313 = vmatmul.mubr.f32.gmra.mrb[0].mxu0 %v246
  %v314 = vpop.f32.mrb[0].mxu0
  %v315 = vadd.f32 %v242, %v314
  %v316 = vpop.f32.mrb[0].mxu0
  %v317 = vadd.f32 %v242, %v316
  %318 = vdwg.mxu0
  %319 = vmatprep.subr.mxu0 %v205
  %320 = vmatpush1.msra.mxu0 %v204
  %321 = vmatprep.subr.mxu0 %v209
  %322 = vmatpush1.msra.mxu0 %v208
  %323 = vmatprep.subr.mxu0 %v213
  %324 = vmatpush1.msra.mxu0 %v212
  %325 = vmatprep.subr.mxu0 %v217
  %326 = vmatpush1.msra.mxu0 %v216
  %327 = vmatprep.subr.mxu0 %v221
  %328 = vmatpush1.msra.mxu0 %v220
  %329 = vmatprep.subr.mxu0 %v225
  %330 = vmatpush1.msra.mxu0 %v224
  %331 = vmatprep.subr.mxu0 %v229
  %332 = vmatpush1.msra.mxu0 %v228
  %333 = vmatprep.subr.mxu0 %v233
  %334 = vmatpush1.msra.mxu0 %v232
  %335 = vmatprep.subr.mxu0 %v237
  %336 = vmatpush1.msra.mxu0 %v236
  %337 = vmatprep.subr.mxu0 0.0
  %338 = vmatpush1.msra.mxu0 0.0
  %339 = vmatprep.subr.mxu0 0.0
  %340 = vmatpush1.msra.mxu0 0.0
  %341 = vmatprep.subr.mxu0 0.0
  %342 = vmatpush1.msra.mxu0 0.0
  %343 = vmatprep.subr.mxu0 0.0
  %344 = vmatpush1.msra.mxu0 0.0
  %345 = vmatprep.subr.mxu0 0.0
  %346 = vmatpush1.msra.mxu0 0.0
  %347 = vmatprep.subr.mxu0 0.0
  %348 = vmatpush1.msra.mxu0 0.0
  %349 = vmatprep.subr.mxu0 0.0
  %350 = vmatpush1.msra.mxu0 0.0
  %351 = vmatprep.subr.mxu0 0.0
  %352 = vmatpush1.msra.mxu0 0.0
  %353 = vmatprep.subr.mxu0 0.0
  %354 = vmatpush1.msra.mxu0 0.0
  %355 = vmatprep.subr.mxu0 0.0
  %356 = vmatpush1.msra.mxu0 0.0
  %357 = vmatprep.subr.mxu0 0.0
  %358 = vmatpush1.msra.mxu0 0.0
  %359 = vmatprep.subr.mxu0 0.0
  %360 = vmatpush1.msra.mxu0 0.0
  %361 = vmatprep.subr.mxu0 0.0
  %362 = vmatpush1.msra.mxu0 0.0
  %363 = vmatprep.subr.mxu0 0.0
  %364 = vmatpush1.msra.mxu0 0.0
  %365 = vmatprep.subr.mxu0 0.0
  %366 = vmatpush1.msra.mxu0 0.0
  %367 = vmatprep.subr.mxu0 0.0
  %368 = vmatpush1.msra.mxu0 0.0
  %369 = vmatprep.subr.mxu0 0.0
  %370 = vmatpush1.msra.mxu0 0.0
  %371 = vmatprep.subr.mxu0 0.0
  %372 = vmatpush1.msra.mxu0 0.0
  %373 = vmatprep.subr.mxu0 0.0
  %374 = vmatpush1.msra.mxu0 0.0
  %375 = vmatprep.subr.mxu0 0.0
  %376 = vmatpush1.msra.mxu0 0.0
  %377 = vmatprep.subr.mxu0 0.0
  %378 = vmatpush1.msra.mxu0 0.0
  %379 = vmatprep.subr.mxu0 0.0
  %380 = vmatpush1.msra.mxu0 0.0
  %381 = vmatprep.subr.mxu0 0.0
  %382 = vmatpush1.msra.mxu0 0.0
  %383 = vmatprep.mubr.f32.mxu0 0.0
  %384 = vmatmul.mubr.f32.gmra.mrb[0].mxu0 %v246
  %v385 = vpop.f32.mrb[0].mxu0
  %v386 = vadd.f32 %v242, %v385
  %v387 = vpop.f32.mrb[0].mxu0
  %v388 = vadd.f32 %v242, %v387
  %389 = vdwg.mxu0
  %390 = vst [vmem:[%s3] sm:$0x3f] %v315
  %391 = vst [vmem:[%s3 + $0x8] sm:$0x3f] %v317
  %s392 = scalar_lea.vmem %s3, 16
  %393 = vst [vmem:[%s392] sm:$0x3f] %v386
  %394 = vst [vmem:[%s392 + $0x8] sm:$0x3f] %v388
  // Predicated region
  $region14: #{conv2d_pallas.1} parent=0 // pred_check
    _
  $region15: #{conv2d_pallas.1} parent=0 // pred_check_branch
    %396 = sbr.rel (0) target = $region17
  $region16: #{conv2d_pallas.1} parent=0 // pred_region
    _
  $region17: #{conv2d_pallas.1} parent=0 // pred_fallthru
    _
  // Predicated region
  $region18: #{conv2d_pallas.1} parent=0 // pred_check
    _
  $region19: #{conv2d_pallas.1} parent=0 // pred_check_branch
    %398 = sbr.rel (0) target = $region21
  $region20: #{conv2d_pallas.1} parent=0 // pred_region
    _
  $region21: #{conv2d_pallas.1} parent=0 // pred_fallthru
    _

</llo_original>
